<compile_context>
chip_gen: v5e
topology: v5e:2x2
jax: 0.10.0
libtpu: 0.0.40
codegen_flags: <defaults>
</compile_context>

<pallas_src>
import jax
import jax.numpy as jnp
from jax.experimental import pallas as pl
from jax.experimental.pallas import tpu as pltpu

# ---------------- configuration (small, consistent with the module) ----------------
BATCH = 2
SEQ = 8
VOCAB = 100
EMB = 64            # embedding dim fed to the BiLSTM
LSTM_HID = 64       # per-direction LSTM hidden size
DIM = 2 * LSTM_HID  # = 128, bilstm output dim == head dim, sits on the TPU lane axis
TM_MAX = 256        # row tile for the head kernel at realistic B*S


# ---------------- Pallas kernel: the span-detection head ----------------
def head_kernel(a_ref, wlin_ref, blin_ref, wse_ref, bse_ref, out_ref):
    # a_ref:    (TM, H) f32   encoder hidden-state row tile
    # wlin_ref: (H, H)  bf16  self.lin.weight, pre-transposed for x @ W
    # blin_ref: (1, H)  f32   self.lin.bias
    # wse_ref:  (2, H)  f32   row 0 = linstart.weight, row 1 = linend.weight
    # bse_ref:  (2,)    f32   [linstart.bias, linend.bias]  (SMEM scalars)
    # out_ref:  (2, TM) f32   lane-dense logits block (row 0 = start, row 1 = end)

    # dropout(p=0.0) == identity (eval semantics)
    # bf16 operands on the MXU, f32 accumulation; bias add + tanh stay f32.
    a_bf16 = a_ref[...].astype(jnp.bfloat16)
    h = jnp.tanh(
        jnp.dot(a_bf16, wlin_ref[...], preferred_element_type=jnp.float32)
        + blin_ref[...]
    )  # (TM, H) f32

    # Both 1-wide heads as a single contraction (2, H) x (TM, H)^T -> (2, TM):
    # output is lane-dense in TM (no N=1 matmul, no (TM,1) masked partial stores).
    logits = jax.lax.dot_general(
        wse_ref[...], h, (((1,), (1,)), ((), ())),
        preferred_element_type=jnp.float32,
    )  # (2, TM)

    out_ref[0:1, :] = logits[0:1, :] + bse_ref[0]
    out_ref[1:2, :] = logits[1:2, :] + bse_ref[1]


def border_span_head(a2d, w_lin, b_lin, w_se, b_se):
    """a2d: (M, DIM) f32 encoder states (M = B*S).  Returns (2, M) f32 logits."""
    M, H = a2d.shape
    # One full-height block for toy M; TM=256 once M grows so each grid step feeds
    # the MXU a tall LHS and the ~0.35us per-step overhead amortizes.  At TM<=256,
    # double-buffered inputs + the resident bf16 weight stay far under the 32 MiB
    # scoped-VMEM default on v5e/v6e/v7x, so no vmem_limit_bytes override is needed.
    TM = min(M, TM_MAX)
    assert M % TM == 0 and TM % 8 == 0 and H % 128 == 0
    grid = (M // TM,)
    return pl.pallas_call(
        head_kernel,
        out_shape=jax.ShapeDtypeStruct((2, M), jnp.float32),
        grid_spec=pl.GridSpec(
            grid=grid,
            in_specs=[
                pl.BlockSpec((TM, H), lambda i: (i, 0)),   # hidden-state row tile
                pl.BlockSpec((H, H), lambda i: (0, 0)),    # lin weight (resident, bf16)
                pl.BlockSpec((1, H), lambda i: (0, 0)),    # lin bias
                pl.BlockSpec((2, H), lambda i: (0, 0)),    # stacked start/end weights
                pl.BlockSpec(memory_space=pltpu.MemorySpace.SMEM),  # start/end biases
            ],
            out_specs=pl.BlockSpec((2, TM), lambda i: (0, i)),      # lane-dense logits
        ),
        compiler_params=pltpu.CompilerParams(
            dimension_semantics=("parallel",),
        ),
    )(a2d, w_lin, b_lin, w_se, b_se)


# ---------------- masked BiLSTM encoder (plain JAX glue) ----------------
# TODO(synk): the BiLSTM recurrence stays in plain JAX (lax.scan); a sequential recurrent
# Pallas kernel has no clean win at these sizes, only the dense head is hand-written.
def _lstm_scan(xemb_t, mask_t, wx, wh, b, reverse):
    # xemb_t: (S, B, E), mask_t: (S, B).  Masked LSTM: padded steps carry state through.
    bsz = xemb_t.shape[1]
    hid = wh.shape[0]

    def step(carry, inp):
        h, c = carry
        x_t, m_t = inp
        gates = x_t @ wx + h @ wh + b                 # (B, 4*hid)
        i, f, g, o = jnp.split(gates, 4, axis=-1)
        i = jax.nn.sigmoid(i)
        f = jax.nn.sigmoid(f)
        o = jax.nn.sigmoid(o)
        g = jnp.tanh(g)
        c_new = f * c + i * g
        h_new = o * jnp.tanh(c_new)
        m = m_t[:, None]
        h = m * h_new + (1.0 - m) * h
        c = m * c_new + (1.0 - m) * c
        return (h, c), h

    init = (jnp.zeros((bsz, hid), jnp.float32), jnp.zeros((bsz, hid), jnp.float32))
    _, hs = jax.lax.scan(step, init, (xemb_t, mask_t), reverse=reverse)
    return hs  # (S, B, hid), time order preserved


def bilstm_encode(xemb, mask, params):
    xemb_t = jnp.transpose(xemb, (1, 0, 2))  # (S, B, E)
    mask_t = jnp.transpose(mask, (1, 0))     # (S, B)
    h_fwd = _lstm_scan(xemb_t, mask_t, params["wx_f"], params["wh_f"], params["b_f"],
                       reverse=False)
    h_bwd = _lstm_scan(xemb_t, mask_t, params["wx_b"], params["wh_b"], params["b_b"],
                       reverse=True)
    a = jnp.concatenate([h_fwd, h_bwd], axis=-1)      # (S, B, 2*hid) = (S, B, DIM)
    return jnp.transpose(a, (1, 0, 2))                # (B, S, DIM)


# ---------------- full forward (glue in plain JAX, dense head in Pallas) ----------------
def border_span_detector_forward(x, params, outlen=None):
    """x: (B, S) int32 token ids.  Returns logits (B, 2, S) float32."""
    B, S = x.shape
    mask = (x != 0).astype(jnp.float32)            # mask = (x != 0).float()
    xemb = params["emb"][x]                        # xemb, _ = self.emb(x)
    a = bilstm_encode(xemb, mask, params)          # a = self.bilstm(xemb, mask=mask)
    # a = self.dropout(a)  with p=0.0 -> identity
    a2d = a.reshape(B * S, DIM)                    # (M, DIM), DIM on the lane axis
    logits2 = border_span_head(
        a2d, params["w_lin"], params["b_lin"], params["w_se"], params["b_se"]
    )                                              # (2, M): row 0 start, row 1 end
    logits = logits2.reshape(2, B, S).transpose(1, 0, 2)   # cat + transpose(1,2) -> (B, 2, S)
    if outlen is not None:                         # self.outlen padding branch
        logits = jnp.pad(logits, ((0, 0), (0, 0), (0, outlen - S)))
    return logits


def init_params(key):
    keys = jax.random.split(key, 9)

    def uni(k, shape, fan_in):
        s = 1.0 / jnp.sqrt(jnp.float32(fan_in))
        return jax.random.uniform(k, shape, jnp.float32, -s, s)

    return {
        "emb": jax.random.normal(keys[0], (VOCAB, EMB), jnp.float32) * 0.1,
        # forward-direction LSTM
        "wx_f": uni(keys[1], (EMB, 4 * LSTM_HID), EMB),
        "wh_f": uni(keys[2], (LSTM_HID, 4 * LSTM_HID), LSTM_HID),
        "b_f": jnp.zeros((4 * LSTM_HID,), jnp.float32),
        # backward-direction LSTM
        "wx_b": uni(keys[3], (EMB, 4 * LSTM_HID), EMB),
        "wh_b": uni(keys[4], (LSTM_HID, 4 * LSTM_HID), LSTM_HID),
        "b_b": jnp.zeros((4 * LSTM_HID,), jnp.float32),
        # extra=True branch: self.lin = Linear(dim, dim); stored transposed for x @ W, bf16
        "w_lin": uni(keys[5], (DIM, DIM), DIM).astype(jnp.bfloat16),
        "b_lin": uni(keys[6], (1, DIM), DIM),
        # self.linstart / self.linend = Linear(dim, 1): stacked rows (2, dim) + (2,) biases
        "w_se": uni(keys[7], (2, DIM), DIM),
        "b_se": uni(keys[8], (2,), DIM),
    }


if __name__ == "__main__":
    key = jax.random.PRNGKey(0)
    k_tok, k_params = jax.random.split(key)

    # token ids; trailing 0s (padding) so the mask path is exercised
    x = jax.random.randint(k_tok, (BATCH, SEQ), 1, VOCAB, dtype=jnp.int32)
    x = x.at[:, -2:].set(0)

    params = init_params(k_params)

    logits = jax.jit(border_span_detector_forward)(x, params)
    jax.block_until_ready(logits)
    assert logits.shape == (BATCH, 2, SEQ)
    assert logits.dtype == jnp.float32
    print("KERNEL_OK")
</pallas_src>

<mosaic_0001>
module attributes {stable_mosaic.version = 11 : i64} {
  func.func @head_kernel(%arg0: i32, %arg1: memref<16x128xf32, #tpu.memory_space<vmem>>, %arg2: memref<128x128xbf16, #tpu.memory_space<vmem>>, %arg3: memref<1x128xf32, #tpu.memory_space<vmem>>, %arg4: memref<2x128xf32, #tpu.memory_space<vmem>>, %arg5: memref<2xf32, #tpu.memory_space<smem>>, %arg6: memref<2x16xf32, #tpu.memory_space<vmem>>) attributes {dimension_semantics = [#tpu.dimension_semantics<parallel>], iteration_bounds = array<i64: 1>, scalar_prefetch = 0 : i64, scratch_operands = 0 : i64, tpu.core_type = #tpu.core_type<tc>, window_params = [{transform_indices = @transform_0, window_bounds = array<i64: 16, 128>}, {pipeline_mode = #tpu.pipeline_mode<synchronous>, transform_indices = @transform_1, window_bounds = array<i64: 128, 128>}, {pipeline_mode = #tpu.pipeline_mode<synchronous>, transform_indices = @transform_2, window_bounds = array<i64: 1, 128>}, {pipeline_mode = #tpu.pipeline_mode<synchronous>, transform_indices = @transform_3, window_bounds = array<i64: 2, 128>}, {transform_indices = @transform_4, window_bounds = array<i64: 2>}, {transform_indices = @transform_5, window_bounds = array<i64: 2, 16>}]} {
    %c0 = arith.constant 0 : index
    %c0_0 = arith.constant 0 : index
    %0 = vector.load %arg1[%c0, %c0_0] : memref<16x128xf32, #tpu.memory_space<vmem>>, vector<16x128xf32>
    %1 = arith.truncf %0 : vector<16x128xf32> to vector<16x128xbf16>
    %c0_1 = arith.constant 0 : index
    %c0_2 = arith.constant 0 : index
    %2 = vector.load %arg2[%c0_1, %c0_2] : memref<128x128xbf16, #tpu.memory_space<vmem>>, vector<128x128xbf16>
    %cst = arith.constant dense<0.000000e+00> : vector<16x128xf32>
    %3 = tpu.matmul %1, %2, %cst {dimension_numbers = #tpu.dot_dimension_numbers<[1], [0], [0], [1], [0, 0, 1, 1], [], []>} : vector<16x128xbf16>, vector<128x128xbf16>, vector<16x128xf32> -> vector<16x128xf32>
    %c0_3 = arith.constant 0 : index
    %c0_4 = arith.constant 0 : index
    %4 = vector.load %arg3[%c0_3, %c0_4] : memref<1x128xf32, #tpu.memory_space<vmem>>, vector<1x128xf32>
    %5 = vector.broadcast %4 : vector<1x128xf32> to vector<16x128xf32>
    %6 = arith.addf %3, %5 : vector<16x128xf32>
    %7 = math.tanh %6 : vector<16x128xf32>
    %c0_5 = arith.constant 0 : index
    %c0_6 = arith.constant 0 : index
    %8 = vector.load %arg4[%c0_5, %c0_6] : memref<2x128xf32, #tpu.memory_space<vmem>>, vector<2x128xf32>
    %cst_7 = arith.constant dense<0.000000e+00> : vector<2x16xf32>
    %9 = tpu.matmul %8, %7, %cst_7 {dimension_numbers = #tpu.dot_dimension_numbers<[1], [1], [0], [0], [0, 0, 1, 0], [], []>} : vector<2x128xf32>, vector<16x128xf32>, vector<2x16xf32> -> vector<2x16xf32>
    %10 = vector.extract_strided_slice %9 {offsets = [0, 0], sizes = [1, 16], strides = [1, 1]} : vector<2x16xf32> to vector<1x16xf32>
    %c0_8 = arith.constant 0 : index
    %11 = memref.load %arg5[%c0_8] : memref<2xf32, #tpu.memory_space<smem>>
    %12 = vector.broadcast %11 : f32 to vector<1x16xf32>
    %13 = arith.addf %10, %12 : vector<1x16xf32>
    %c0_9 = arith.constant 0 : index
    %c0_10 = arith.constant 0 : index
    %14 = vector.load %arg6[%c0_9, %c0_10] : memref<2x16xf32, #tpu.memory_space<vmem>>, vector<1x16xf32>
    tpu.vector_store %arg6[%c0_9, %c0_10], %13 {strides = array<i32>} : memref<2x16xf32, #tpu.memory_space<vmem>>, vector<1x16xf32>,
    %15 = vector.extract_strided_slice %9 {offsets = [1, 0], sizes = [1, 16], strides = [1, 1]} : vector<2x16xf32> to vector<1x16xf32>
    %c1 = arith.constant 1 : index
    %16 = memref.load %arg5[%c1] : memref<2xf32, #tpu.memory_space<smem>>
    %17 = vector.broadcast %16 : f32 to vector<1x16xf32>
    %18 = arith.addf %15, %17 : vector<1x16xf32>
    %c1_11 = arith.constant 1 : index
    %c0_12 = arith.constant 0 : index
    %19 = vector.load %arg6[%c1_11, %c0_12] : memref<2x16xf32, #tpu.memory_space<vmem>>, vector<1x16xf32>
    tpu.vector_store %arg6[%c1_11, %c0_12], %18 {strides = array<i32>} : memref<2x16xf32, #tpu.memory_space<vmem>>, vector<1x16xf32>,
    return
  }
  func.func @transform_0(%arg0: i32) -> (i32, i32) {
    %c0_i32 = arith.constant 0 : i32
    %c0_i32_0 = arith.constant 0 : i32
    return %arg0, %c0_i32 : i32, i32
  }
  func.func @transform_1(%arg0: i32) -> (i32, i32) {
    %c0_i32 = arith.constant 0 : i32
    %c0_i32_0 = arith.constant 0 : i32
    %c0_i32_1 = arith.constant 0 : i32
    return %c0_i32, %c0_i32_0 : i32, i32
  }
  func.func @transform_2(%arg0: i32) -> (i32, i32) {
    %c0_i32 = arith.constant 0 : i32
    %c0_i32_0 = arith.constant 0 : i32
    %c0_i32_1 = arith.constant 0 : i32
    return %c0_i32, %c0_i32_0 : i32, i32
  }
  func.func @transform_3(%arg0: i32) -> (i32, i32) {
    %c0_i32 = arith.constant 0 : i32
    %c0_i32_0 = arith.constant 0 : i32
    %c0_i32_1 = arith.constant 0 : i32
    return %c0_i32, %c0_i32_0 : i32, i32
  }
  func.func @transform_4(%arg0: i32) -> i32 {
    %c0_i32 = arith.constant 0 : i32
    %c0_i32_0 = arith.constant 0 : i32
    return %c0_i32 : i32
  }
  func.func @transform_5(%arg0: i32) -> (i32, i32) {
    %c0_i32 = arith.constant 0 : i32
    %c0_i32_0 = arith.constant 0 : i32
    return %c0_i32, %arg0 : i32, i32
  }
}

</mosaic_0001>

<llo_original>
// kernel: custom-call
$region0: #{custom-call}
  %s0 = inlined_call_operand.vmem [shape: f32[2,64], index: 0, kind: output, shape index: {}]

// kernel: border_span_detector_forward.1
$region0: #{border_span_detector_forward.1}
  #allocation0 [shape = 'u32[]', space=smem, size = 0x4, offset = 0x4, fixed_abs, tag = 'smem constant byte address 0x4 - core index']
  #allocation1 [shape = 'u32[72,128]{1,0:T(1,128)}', space=vmem, size = 0x9000, scoped, tag = 'internal scratch']
  %s0 = inlined_call_operand.vmem [shape: f32[16,128], index: 0, kind: input, shape index: {}]
  %s1 = inlined_call_operand.vmem [shape: bf16[128,128], index: 1, kind: input, shape index: {}]
  %s2 = inlined_call_operand.vmem [shape: f32[1,128], index: 2, kind: input, shape index: {}]
  %s3 = inlined_call_operand.vmem [shape: f32[2,128], index: 3, kind: input, shape index: {}]
  %s4 = inlined_call_operand.vmem [shape: f32[2], index: 4, kind: input, shape index: {}]
  %s5 = inlined_call_operand.vmem [shape: f32[2,16], index: 5, kind: output, shape index: {}]
  %s6 = sld [smem:[#allocation0]]
  $region34: #{border_span_detector_forward.1} parent=0
    _
  %s8 = ssub.s32 1, %s6
  %s9 = scalar_select 0, %s8, %s6
  $region1: #{border_span_detector_forward.1} parent=0
    #allocation2 [shape = 'u8[512]{0}', space=smem, size = 0x200, scoped, tag = 'input window, operand 4, single buffered']
    #allocation3 [shape = 's32[1]{0}', space=sflag, size = 0x4, scoped, tag = 'scoped memory for border_span_detector_forward.1']
    %10 = vsyncpa [#allocation3], 0
    // Predicated region
    $region2: #{border_span_detector_forward.1} parent=1 // pred_check
      _
    $region3: #{border_span_detector_forward.1} parent=1 // pred_check_branch
      %12 = sbr.rel (0) target = $region5
    $region4: #{border_span_detector_forward.1} parent=1 // pred_region
      _
    $region5: #{border_span_detector_forward.1} parent=1 // pred_fallthru
      _
    // Predicated region
    $region6: #{border_span_detector_forward.1} parent=1 // pred_check
      _
    $region7: #{border_span_detector_forward.1} parent=1 // pred_check_branch
      %14 = sbr.rel (0) target = $region9
    $region8: #{border_span_detector_forward.1} parent=1 // pred_region
      _
    $region9: #{border_span_detector_forward.1} parent=1 // pred_fallthru
      _
    // Predicated region
    $region10: #{border_span_detector_forward.1} parent=1 // pred_check
      _
    $region11: #{border_span_detector_forward.1} parent=1 // pred_check_branch
      %16 = sbr.rel (0) target = $region13
    $region12: #{border_span_detector_forward.1} parent=1 // pred_region
      _
    $region13: #{border_span_detector_forward.1} parent=1 // pred_fallthru
      _
    // Predicated region
    $region14: #{border_span_detector_forward.1} parent=1 // pred_check
      _
    $region15: #{border_span_detector_forward.1} parent=1 // pred_check_branch
      %18 = sbr.rel (0) target = $region17
    $region16: #{border_span_detector_forward.1} parent=1 // pred_region
      _
    $region17: #{border_span_detector_forward.1} parent=1 // pred_fallthru
      _
    // Predicated region
    $region18: #{border_span_detector_forward.1} parent=1 // pred_check
      _
    $region19: #{border_span_detector_forward.1} parent=1 // pred_check_branch
      %20 = sbr.rel (0) target = $region21
    $region20: #{border_span_detector_forward.1} parent=1 // pred_region
      %22 = vsyncadd [#allocation3], 0
      %s24 = sshll.u32 %s4, 4
      %s25 = int_to_ptr.vmem [resolvable:$true] %s24
      %27 = dma.vmem_to_smem %s25, 16, [#allocation2], [#allocation3]
    $region21: #{border_span_detector_forward.1} parent=1 // pred_fallthru
      _
    // Predicated region
    $region22: #{border_span_detector_forward.1} parent=1 // pred_check
      _
    $region23: #{border_span_detector_forward.1} parent=1 // pred_check_branch
      %29 = sbr.rel (0) target = $region25
    $region24: #{border_span_detector_forward.1} parent=1 // pred_region
      %31 = dma.done [#allocation3], 16
    $region25: #{border_span_detector_forward.1} parent=1 // pred_fallthru
      _
    %32 = sfence
    %v33 = vld [vmem:[%s0] sm:$0xff]
    %v34 = vld [vmem:[%s0 + $0x8] sm:$0xff]
    %v35 = vpack.c.bf16 %v34, %v33
    %v36 = vld [vmem:[%s1] sm:$0xf]
    %v37 = vld [vmem:[%s1 + $0x4] sm:$0xf]
    %v38 = vld [vmem:[%s1 + $0x8] sm:$0xf]
    %v39 = vld [vmem:[%s1 + $0xc] sm:$0xf]
    %v40 = vld [vmem:[%s1 + $0x10] sm:$0xf]
    %v41 = vld [vmem:[%s1 + $0x14] sm:$0xf]
    %v42 = vld [vmem:[%s1 + $0x18] sm:$0xf]
    %v43 = vld [vmem:[%s1 + $0x1c] sm:$0xf]
    %v44 = vld [vmem:[%s1 + $0x20] sm:$0xf]
    %v45 = vld [vmem:[%s1 + $0x24] sm:$0xf]
    %v46 = vld [vmem:[%s1 + $0x28] sm:$0xf]
    %v47 = vld [vmem:[%s1 + $0x2c] sm:$0xf]
    %v48 = vld [vmem:[%s1 + $0x30] sm:$0xf]
    %v49 = vld [vmem:[%s1 + $0x34] sm:$0xf]
    %v50 = vld [vmem:[%s1 + $0x38] sm:$0xf]
    %v51 = vld [vmem:[%s1 + $0x3c] sm:$0xf]
    %v52 = vld [vmem:[%s2] sm:$0x1]
    %v54 = vperm.slane %v52, 0
    %v72 = vunpack.c.l.b16 %v36
    %v73 = vunpack.c.l.b16 %v37
    %v74 = vunpack.c.l.b16 %v38
    %v75 = vunpack.c.l.b16 %v39
    %v76 = vunpack.c.l.b16 %v40
    %v77 = vunpack.c.l.b16 %v41
    %v78 = vunpack.c.l.b16 %v42
    %v79 = vunpack.c.l.b16 %v43
    %v80 = vunpack.c.l.b16 %v44
    %v81 = vunpack.c.l.b16 %v45
    %v82 = vunpack.c.l.b16 %v46
    %v83 = vunpack.c.l.b16 %v47
    %v84 = vunpack.c.l.b16 %v48
    %v85 = vunpack.c.l.b16 %v49
    %v86 = vunpack.c.l.b16 %v50
    %v87 = vunpack.c.l.b16 %v51
    %v88 = vpack.c.b16 %v73, %v72
    %v89 = vpack.c.b16 %v75, %v74
    %v90 = vpack.c.b16 %v77, %v76
    %v91 = vpack.c.b16 %v79, %v78
    %v92 = vpack.c.b16 %v81, %v80
    %v93 = vpack.c.b16 %v83, %v82
    %v94 = vpack.c.b16 %v85, %v84
    %v95 = vpack.c.b16 %v87, %v86
    %104 = vmatpush.bf16.msra.mxu0 %v95
    %105 = vmatpush.bf16.msra.mxu0 %v94
    %106 = vmatpush.bf16.msra.mxu0 %v93
    %107 = vmatpush.bf16.msra.mxu0 %v92
    %108 = vmatpush.bf16.msra.mxu0 %v91
    %109 = vmatpush.bf16.msra.mxu0 %v90
    %110 = vmatpush.bf16.msra.mxu0 %v89
    %111 = vmatpush.bf16.msra.mxu0 %v88
    %112 = vmatmul.bf16.gmra.mxu0 %v35
    %v113 = vpop.f32.mrf.mxu0
    %v114 = vadd.f32 %v54, %v113
    %v115 = vpop.f32.mrf.mxu0
    %v116 = vadd.f32 %v54, %v115
    %117 = vdwg.mxu0
    %v118 = vtanh.pop %v114
    %v119 = vtanh.pop %v116
    %v120 = vld [vmem:[%s3] sm:$0x3]
    %121 = vmatpush.xpose.msra.mxu0 0.0
    %122 = vmatpush.xpose.msra.mxu0 0.0
    %123 = vmatpush.xpose.msra.mxu0 0.0
    %124 = vmatpush.xpose.msra.mxu0 0.0
    %125 = vmatpush.xpose.msra.mxu0 0.0
    %126 = vmatpush.xpose.msra.mxu0 0.0
    %127 = vmatpush.xpose.msra.mxu0 0.0
    %128 = vmatpush.xpose.msra.mxu0 0.0
    %129 = vmatpush.xpose.msra.mxu0 0.0
    %130 = vmatpush.xpose.msra.mxu0 0.0
    %131 = vmatpush.xpose.msra.mxu0 0.0
    %132 = vmatpush.xpose.msra.mxu0 0.0
    %133 = vmatpush.xpose.msra.mxu0 0.0
    %134 = vmatpush.xpose.msra.mxu0 0.0
    %135 = vmatpush.xpose.msra.mxu0 %v119
    %136 = vmatpush.xpose.msra.mxu0 %v118
    %137 = vmatmul.f32.gmra.mxu0 %v120
    %v138 = vpop.f32.mrf.mxu0
    %v139 = vadd.f32 0.0, %v138
    %140 = vdwg.mxu0
    %s141 = sld [smem:[#allocation2]]
    %v142 = vstv %s141
    %v143 = vadd.f32 %v139, %v142
    %vm144 = vcmask 122880
    %145 = vst.msk [vmem:[%s5] sm:$0x1] %vm144, %v143
    %s146 = sld [smem:[#allocation2 + $0x1]]
    %v147 = vstv %s146
    %v148 = vadd.f32 %v139, %v147
    %vm149 = vcmask 123905
    %150 = vst.msk [vmem:[%s5] sm:$0x2] %vm149, %v148
    // Predicated region
    $region26: #{border_span_detector_forward.1} parent=1 // pred_check
      _
    $region27: #{border_span_detector_forward.1} parent=1 // pred_check_branch
      %152 = sbr.rel (0) target = $region29
    $region28: #{border_span_detector_forward.1} parent=1 // pred_region
      _
    $region29: #{border_span_detector_forward.1} parent=1 // pred_fallthru
      _
    // Predicated region
    $region30: #{border_span_detector_forward.1} parent=1 // pred_check
      _
    $region31: #{border_span_detector_forward.1} parent=1 // pred_check_branch
      %154 = sbr.rel (0) target = $region33
    $region32: #{border_span_detector_forward.1} parent=1 // pred_region
      _
    $region33: #{border_span_detector_forward.1} parent=1 // pred_fallthru
      _
    %155 = vsyncpa [#allocation3], 1

</llo_original>
